<compile_context>
chip_gen: v7x
topology: tpu7x:2x2x1
jax: 0.10.0
libtpu: 0.0.40
codegen_flags: <defaults>
</compile_context>

<pallas_src>
import functools

import jax
import jax.numpy as jnp
from jax.experimental import pallas as pl
from jax.experimental.pallas import tpu as pltpu


def _round_up(x, m):
    return ((x + m - 1) // m) * m


def _vmem_capacity_bytes():
    """Per-core VMEM capacity (v5e/v6e: 128 MiB, v7x: 64 MiB); safe fallback."""
    try:
        info = pltpu.get_tpu_info()
        cap = getattr(info, "vmem_capacity_bytes", None)
        if cap:
            return int(cap)
    except Exception:
        pass
    return 128 * 1024 * 1024


def _vmem_tensor_bytes(shape, dtype):
    """Bytes a tensor occupies in VMEM with (sublane, 128-lane) tiling."""
    itemsize = jnp.dtype(dtype).itemsize
    shape = tuple(shape)
    if len(shape) == 1:
        shape = (1,) + shape
    *lead, r, c = shape
    sub = 8 * max(1, 4 // itemsize)          # 8 for f32, 16 for bf16
    lead_prod = 1
    for d in lead:
        lead_prod *= int(d)
    return lead_prod * _round_up(r, sub) * _round_up(c, 128) * itemsize


def _row_bytes(cols, dtype):
    """Per-row VMEM bytes of a (tile_n, cols) block (lane-padded)."""
    return _round_up(cols, 128) * jnp.dtype(dtype).itemsize


# ----------------------------------------------------------------------------
# Kernel
# ----------------------------------------------------------------------------
def _s2decoder_kernel(n_layers, compute_dtype,
                      x_ref, ew_ref, eb_ref, fw_ref, fb_ref,
                      owx_ref, owh_ref, ob_ref, z_ref, zacc_ref):
    # x tile: (tile_n, input_size); cast to compute dtype in-kernel (no-op for f32).
    x = x_ref[...].astype(compute_dtype)

    # x-path of the output layer (+ bias), parked in a f32 VMEM scratch so that
    # neither x nor the partial output stays live in vregs across the fc loop.
    zacc_ref[...] = (jnp.dot(x, owx_ref[...], preferred_element_type=jnp.float32)
                     + ob_ref[...])

    # embed (Linear, no activation).
    h = jnp.dot(x, ew_ref[...], preferred_element_type=jnp.float32) + eb_ref[...]

    # n_layers x (Linear(hidden, hidden) + ReLU); n_layers is static -> unrolled.
    for i in range(n_layers):
        h = jnp.dot(h.astype(compute_dtype), fw_ref[i],
                    preferred_element_type=jnp.float32) + fb_ref[i]
        h = jnp.maximum(h, 0.0)

    # h-path of the output layer; combine with the parked x-path and store.
    z = zacc_ref[...] + jnp.dot(h.astype(compute_dtype), owh_ref[...],
                                preferred_element_type=jnp.float32)
    z_ref[...] = z.astype(z_ref.dtype)


# ----------------------------------------------------------------------------
# One-time parameter packing (hoisted out of the per-call path)
# ----------------------------------------------------------------------------
def prepare_s2decoder_params(params, compute_dtype=None):
    """Cast/split S2Decoder parameters once for the Pallas kernel."""
    if isinstance(params, dict) and params.get("_prepared", False):
        return params

    embed_w = params["embed_w"]           # (input_size, hidden)
    input_size, hidden = embed_w.shape
    out_w = params["out_w"]               # (input_size + hidden, output_size)
    output_size = int(out_w.shape[1])
    n_layers = int(params["fc_w"].shape[0])
    if compute_dtype is None:
        compute_dtype = embed_w.dtype     # pass jnp.bfloat16 on v6e/v7x

    return {
        "_prepared": True,
        "input_size": int(input_size),
        "hidden": int(hidden),
        "output_size": output_size,
        "n_layers": n_layers,
        "compute_dtype": jnp.dtype(compute_dtype),
        "embed_w": embed_w.astype(compute_dtype),
        "embed_b": params["embed_b"].reshape(1, hidden).astype(jnp.float32),
        "fc_w": params["fc_w"].astype(compute_dtype),
        "fc_b": params["fc_b"].reshape(n_layers, 1, hidden).astype(jnp.float32),
        "out_w_x": out_w[:input_size].astype(compute_dtype),
        "out_w_h": out_w[input_size:].astype(compute_dtype),
        "out_b": params["out_b"].reshape(1, output_size).astype(jnp.float32),
        "loggamma": params["loggamma"],
    }


# ----------------------------------------------------------------------------
# Forward
# ----------------------------------------------------------------------------
def s2decoder_forward(inputs, params, *, tile_n_cap=256, compute_dtype=None):
    """Returns (z_hat, loggamma, gamma), matching the PyTorch forward."""
    p = prepare_s2decoder_params(params, compute_dtype)
    input_size = p["input_size"]
    hidden = p["hidden"]
    output_size = p["output_size"]
    n_layers = p["n_layers"]
    cdt = p["compute_dtype"]

    x = inputs.reshape(-1, input_size)    # (N, input_size)
    n = x.shape[0]
    out_dtype = inputs.dtype

    # ---- row-tile sizing against a generation-aware VMEM budget -------------
    vmem_cap = _vmem_capacity_bytes()
    budget = min(vmem_cap // 2, 32 * 1024 * 1024)

    weights = (p["embed_w"], p["embed_b"], p["fc_w"], p["fc_b"],
               p["out_w_x"], p["out_w_h"], p["out_b"])
    # Constant-index blocks are still double-buffered by the default pipeline.
    weight_bytes = 2 * sum(_vmem_tensor_bytes(w.shape, w.dtype) for w in weights)
    per_row = (2 * _row_bytes(input_size, x.dtype)      # x tile (double-buffered)
               + 2 * _row_bytes(output_size, out_dtype) # z tile (double-buffered)
               + _row_bytes(output_size, jnp.float32))  # zacc scratch
    avail = max(budget - weight_bytes, 8 * per_row)
    tile_n = max(8, min(tile_n_cap, (avail // per_row) // 8 * 8))
    tile_n = min(tile_n, _round_up(n, 8))               # don't tile past the data
    grid = pl.cdiv(n, tile_n)                            # ragged last block is clipped

    vmem_limit = int(min(max(4 * (weight_bytes + tile_n * per_row),
                             16 * 1024 * 1024),
                         vmem_cap * 3 // 4))

    kernel = functools.partial(_s2decoder_kernel, n_layers, cdt)

    z_hat = pl.pallas_call(
        kernel,
        out_shape=jax.ShapeDtypeStruct((n, output_size), out_dtype),
        grid_spec=pltpu.PrefetchScalarGridSpec(
            num_scalar_prefetch=0,
            grid=(grid,),
            in_specs=[
                pl.BlockSpec((tile_n, input_size), lambda i: (i, 0)),
                pl.BlockSpec((input_size, hidden), lambda i: (0, 0)),
                pl.BlockSpec((1, hidden), lambda i: (0, 0)),
                pl.BlockSpec((n_layers, hidden, hidden), lambda i: (0, 0, 0)),
                pl.BlockSpec((n_layers, 1, hidden), lambda i: (0, 0, 0)),
                pl.BlockSpec((input_size, output_size), lambda i: (0, 0)),
                pl.BlockSpec((hidden, output_size), lambda i: (0, 0)),
                pl.BlockSpec((1, output_size), lambda i: (0, 0)),
            ],
            out_specs=pl.BlockSpec((tile_n, output_size), lambda i: (i, 0)),
            scratch_shapes=[pltpu.VMEM((tile_n, output_size), jnp.float32)],
        ),
        compiler_params=pltpu.CompilerParams(
            dimension_semantics=("parallel",),
            vmem_limit_bytes=vmem_limit),
    )(x, p["embed_w"], p["embed_b"], p["fc_w"], p["fc_b"],
      p["out_w_x"], p["out_w_h"], p["out_b"])

    loggamma = p["loggamma"]
    gamma = jnp.exp(loggamma)             # scalar glue, not worth a kernel
    return z_hat, loggamma, gamma


# ----------------------------------------------------------------------------
# Test harness
# ----------------------------------------------------------------------------
def _make_params(key, input_size, output_size, hidden_size, n_layers,
                 dtype=jnp.float32):
    """Deterministic synthetic parameters (shapes from S2Decoder.__init__)."""
    ks = jax.random.split(key, 7)
    scale = 0.05
    return {
        "embed_w": scale * jax.random.normal(ks[0], (input_size, hidden_size), dtype),
        "embed_b": scale * jax.random.normal(ks[1], (1, hidden_size), dtype),
        "fc_w": scale * jax.random.normal(ks[2], (n_layers, hidden_size, hidden_size), dtype),
        "fc_b": scale * jax.random.normal(ks[3], (n_layers, 1, hidden_size), dtype),
        "out_w": scale * jax.random.normal(ks[4], (input_size + hidden_size, output_size), dtype),
        "out_b": scale * jax.random.normal(ks[5], (1, output_size), dtype),
        "loggamma": jnp.zeros((), dtype),   # Parameter(torch.tensor(0.0))
    }


def _reference_forward(inputs, params):
    """Pure-JAX reference mirroring the PyTorch module exactly."""
    input_size = params["embed_w"].shape[0]
    x = inputs.reshape(-1, input_size)
    h = x @ params["embed_w"] + params["embed_b"]
    for i in range(params["fc_w"].shape[0]):
        h = jnp.maximum(h @ params["fc_w"][i] + params["fc_b"][i], 0.0)
    cat = jnp.concatenate([x, h], axis=-1)
    z = cat @ params["out_w"] + params["out_b"]
    return z, params["loggamma"], jnp.exp(params["loggamma"])


if __name__ == "__main__":
    # Shapes consistent with the module: inputs (batch=2, seq=4, input=16)
    # -> flattened to (8, 16); hidden=32, output=16, n_layers=2.
    input_size, output_size, hidden_size, n_layers, batch_size = 16, 16, 32, 2, 2

    key = jax.random.PRNGKey(0)
    k_in, k_par = jax.random.split(key)
    inputs = jax.random.normal(k_in, (batch_size, 4, input_size), jnp.float32)
    params = _make_params(k_par, input_size, output_size, hidden_size, n_layers)

    # One-time weight packing, amortized across forward calls.
    prepped = prepare_s2decoder_params(params)

    z_hat, loggamma, gamma = s2decoder_forward(inputs, prepped)
    jax.block_until_ready(z_hat)
    jax.block_until_ready(gamma)

    z_ref, lg_ref, g_ref = _reference_forward(inputs, params)
    assert z_hat.shape == (batch_size * 4, output_size)
    assert jnp.allclose(z_hat, z_ref, atol=1e-5, rtol=1e-5)
    assert jnp.allclose(loggamma, lg_ref) and jnp.allclose(gamma, g_ref)

    # Second shape: N = 260 rows -> 2-step parallel grid with a clipped ragged
    # final block (validates the no-padding input/output path).
    inputs2 = jax.random.normal(jax.random.PRNGKey(1), (20, 13, input_size),
                                jnp.float32)
    z2, _, _ = s2decoder_forward(inputs2, prepped)
    jax.block_until_ready(z2)
    z2_ref, _, _ = _reference_forward(inputs2, params)
    assert z2.shape == (20 * 13, output_size)
    assert jnp.allclose(z2, z2_ref, atol=1e-5, rtol=1e-5)

    # Optional bf16 compute path (halves weight/activation DMA bytes and doubles
    # MXU throughput on v6e/v7x); accumulation stays f32, so error is small.
    prepped_bf16 = prepare_s2decoder_params(params, compute_dtype=jnp.bfloat16)
    z3, _, _ = s2decoder_forward(inputs2, prepped_bf16)
    jax.block_until_ready(z3)
    assert jnp.allclose(z3, z2_ref, atol=5e-2, rtol=5e-2)

    print("KERNEL_OK")
</pallas_src>

<mosaic_0001>
module attributes {stable_mosaic.version = 11 : i64} {
  func.func @_s2decoder_kernel(%arg0: i32, %arg1: memref<8x16xf32, #tpu.memory_space<vmem>>, %arg2: memref<16x32xf32, #tpu.memory_space<vmem>>, %arg3: memref<1x32xf32, #tpu.memory_space<vmem>>, %arg4: memref<2x32x32xf32, #tpu.memory_space<vmem>>, %arg5: memref<2x1x32xf32, #tpu.memory_space<vmem>>, %arg6: memref<16x16xf32, #tpu.memory_space<vmem>>, %arg7: memref<32x16xf32, #tpu.memory_space<vmem>>, %arg8: memref<1x16xf32, #tpu.memory_space<vmem>>, %arg9: memref<8x16xf32, #tpu.memory_space<vmem>>, %arg10: memref<8x16xf32, #tpu.memory_space<vmem>>) attributes {dimension_semantics = [#tpu.dimension_semantics<parallel>], iteration_bounds = array<i64: 1>, scalar_prefetch = 0 : i64, scratch_operands = 1 : i64, tpu.core_type = #tpu.core_type<tc>, window_params = [{transform_indices = @transform_0, window_bounds = array<i64: 8, 16>}, {pipeline_mode = #tpu.pipeline_mode<synchronous>, transform_indices = @transform_1, window_bounds = array<i64: 16, 32>}, {pipeline_mode = #tpu.pipeline_mode<synchronous>, transform_indices = @transform_2, window_bounds = array<i64: 1, 32>}, {pipeline_mode = #tpu.pipeline_mode<synchronous>, transform_indices = @transform_3, window_bounds = array<i64: 2, 32, 32>}, {pipeline_mode = #tpu.pipeline_mode<synchronous>, transform_indices = @transform_4, window_bounds = array<i64: 2, 1, 32>}, {pipeline_mode = #tpu.pipeline_mode<synchronous>, transform_indices = @transform_5, window_bounds = array<i64: 16, 16>}, {pipeline_mode = #tpu.pipeline_mode<synchronous>, transform_indices = @transform_6, window_bounds = array<i64: 32, 16>}, {pipeline_mode = #tpu.pipeline_mode<synchronous>, transform_indices = @transform_7, window_bounds = array<i64: 1, 16>}, {transform_indices = @transform_8, window_bounds = array<i64: 8, 16>}]} {
    %c0 = arith.constant 0 : index
    %c0_0 = arith.constant 0 : index
    %0 = vector.load %arg1[%c0, %c0_0] : memref<8x16xf32, #tpu.memory_space<vmem>>, vector<8x16xf32>
    %c0_1 = arith.constant 0 : index
    %c0_2 = arith.constant 0 : index
    %1 = vector.load %arg6[%c0_1, %c0_2] : memref<16x16xf32, #tpu.memory_space<vmem>>, vector<16x16xf32>
    %cst = arith.constant dense<0.000000e+00> : vector<8x16xf32>
    %2 = tpu.matmul %0, %1, %cst {dimension_numbers = #tpu.dot_dimension_numbers<[1], [0], [0], [1], [0, 0, 1, 1], [], []>} : vector<8x16xf32>, vector<16x16xf32>, vector<8x16xf32> -> vector<8x16xf32>
    %c0_3 = arith.constant 0 : index
    %c0_4 = arith.constant 0 : index
    %3 = vector.load %arg8[%c0_3, %c0_4] : memref<1x16xf32, #tpu.memory_space<vmem>>, vector<1x16xf32>
    %4 = vector.broadcast %3 : vector<1x16xf32> to vector<8x16xf32>
    %5 = arith.addf %2, %4 : vector<8x16xf32>
    %c0_5 = arith.constant 0 : index
    %c0_6 = arith.constant 0 : index
    %6 = vector.load %arg10[%c0_5, %c0_6] : memref<8x16xf32, #tpu.memory_space<vmem>>, vector<8x16xf32>
    tpu.vector_store %arg10[%c0_5, %c0_6], %5 {strides = array<i32>} : memref<8x16xf32, #tpu.memory_space<vmem>>, vector<8x16xf32>,
    %c0_7 = arith.constant 0 : index
    %c0_8 = arith.constant 0 : index
    %7 = vector.load %arg2[%c0_7, %c0_8] : memref<16x32xf32, #tpu.memory_space<vmem>>, vector<16x32xf32>
    %cst_9 = arith.constant dense<0.000000e+00> : vector<8x32xf32>
    %8 = tpu.matmul %0, %7, %cst_9 {dimension_numbers = #tpu.dot_dimension_numbers<[1], [0], [0], [1], [0, 0, 1, 1], [], []>} : vector<8x16xf32>, vector<16x32xf32>, vector<8x32xf32> -> vector<8x32xf32>
    %c0_10 = arith.constant 0 : index
    %c0_11 = arith.constant 0 : index
    %9 = vector.load %arg3[%c0_10, %c0_11] : memref<1x32xf32, #tpu.memory_space<vmem>>, vector<1x32xf32>
    %10 = vector.broadcast %9 : vector<1x32xf32> to vector<8x32xf32>
    %11 = arith.addf %8, %10 : vector<8x32xf32>
    %c0_12 = arith.constant 0 : index
    %c0_13 = arith.constant 0 : index
    %c0_14 = arith.constant 0 : index
    %12 = vector.load %arg4[%c0_12, %c0_13, %c0_14] : memref<2x32x32xf32, #tpu.memory_space<vmem>>, vector<1x32x32xf32>
    %13 = vector.shape_cast %12 : vector<1x32x32xf32> to vector<32x32xf32>
    %cst_15 = arith.constant dense<0.000000e+00> : vector<8x32xf32>
    %14 = tpu.matmul %11, %13, %cst_15 {dimension_numbers = #tpu.dot_dimension_numbers<[1], [0], [0], [1], [0, 0, 1, 1], [], []>} : vector<8x32xf32>, vector<32x32xf32>, vector<8x32xf32> -> vector<8x32xf32>
    %c0_16 = arith.constant 0 : index
    %c0_17 = arith.constant 0 : index
    %c0_18 = arith.constant 0 : index
    %15 = vector.load %arg5[%c0_16, %c0_17, %c0_18] : memref<2x1x32xf32, #tpu.memory_space<vmem>>, vector<1x1x32xf32>
    %16 = vector.shape_cast %15 : vector<1x1x32xf32> to vector<1x32xf32>
    %17 = vector.broadcast %16 : vector<1x32xf32> to vector<8x32xf32>
    %18 = arith.addf %14, %17 : vector<8x32xf32>
    %cst_19 = arith.constant 0.000000e+00 : f32
    %19 = vector.broadcast %cst_19 : f32 to vector<8x32xf32>
    %20 = arith.maximumf %18, %19 : vector<8x32xf32>
    %c1 = arith.constant 1 : index
    %c0_20 = arith.constant 0 : index
    %c0_21 = arith.constant 0 : index
    %21 = vector.load %arg4[%c1, %c0_20, %c0_21] : memref<2x32x32xf32, #tpu.memory_space<vmem>>, vector<1x32x32xf32>
    %22 = vector.shape_cast %21 : vector<1x32x32xf32> to vector<32x32xf32>
    %cst_22 = arith.constant dense<0.000000e+00> : vector<8x32xf32>
    %23 = tpu.matmul %20, %22, %cst_22 {dimension_numbers = #tpu.dot_dimension_numbers<[1], [0], [0], [1], [0, 0, 1, 1], [], []>} : vector<8x32xf32>, vector<32x32xf32>, vector<8x32xf32> -> vector<8x32xf32>
    %c1_23 = arith.constant 1 : index
    %c0_24 = arith.constant 0 : index
    %c0_25 = arith.constant 0 : index
    %24 = vector.load %arg5[%c1_23, %c0_24, %c0_25] : memref<2x1x32xf32, #tpu.memory_space<vmem>>, vector<1x1x32xf32>
    %25 = vector.shape_cast %24 : vector<1x1x32xf32> to vector<1x32xf32>
    %26 = vector.broadcast %25 : vector<1x32xf32> to vector<8x32xf32>
    %27 = arith.addf %23, %26 : vector<8x32xf32>
    %cst_26 = arith.constant 0.000000e+00 : f32
    %28 = vector.broadcast %cst_26 : f32 to vector<8x32xf32>
    %29 = arith.maximumf %27, %28 : vector<8x32xf32>
    %c0_27 = arith.constant 0 : index
    %c0_28 = arith.constant 0 : index
    %30 = vector.load %arg10[%c0_27, %c0_28] : memref<8x16xf32, #tpu.memory_space<vmem>>, vector<8x16xf32>
    %c0_29 = arith.constant 0 : index
    %c0_30 = arith.constant 0 : index
    %31 = vector.load %arg7[%c0_29, %c0_30] : memref<32x16xf32, #tpu.memory_space<vmem>>, vector<32x16xf32>
    %cst_31 = arith.constant dense<0.000000e+00> : vector<8x16xf32>
    %32 = tpu.matmul %29, %31, %cst_31 {dimension_numbers = #tpu.dot_dimension_numbers<[1], [0], [0], [1], [0, 0, 1, 1], [], []>} : vector<8x32xf32>, vector<32x16xf32>, vector<8x16xf32> -> vector<8x16xf32>
    %33 = arith.addf %30, %32 : vector<8x16xf32>
    %c0_32 = arith.constant 0 : index
    %c0_33 = arith.constant 0 : index
    %34 = vector.load %arg9[%c0_32, %c0_33] : memref<8x16xf32, #tpu.memory_space<vmem>>, vector<8x16xf32>
    tpu.vector_store %arg9[%c0_32, %c0_33], %33 {strides = array<i32>} : memref<8x16xf32, #tpu.memory_space<vmem>>, vector<8x16xf32>,
    return
  }
  func.func @transform_0(%arg0: i32) -> (i32, i32) {
    %c0_i32 = arith.constant 0 : i32
    %c0_i32_0 = arith.constant 0 : i32
    return %arg0, %c0_i32 : i32, i32
  }
  func.func @transform_1(%arg0: i32) -> (i32, i32) {
    %c0_i32 = arith.constant 0 : i32
    %c0_i32_0 = arith.constant 0 : i32
    %c0_i32_1 = arith.constant 0 : i32
    return %c0_i32, %c0_i32_0 : i32, i32
  }
  func.func @transform_2(%arg0: i32) -> (i32, i32) {
    %c0_i32 = arith.constant 0 : i32
    %c0_i32_0 = arith.constant 0 : i32
    %c0_i32_1 = arith.constant 0 : i32
    return %c0_i32, %c0_i32_0 : i32, i32
  }
  func.func @transform_3(%arg0: i32) -> (i32, i32, i32) {
    %c0_i32 = arith.constant 0 : i32
    %c0_i32_0 = arith.constant 0 : i32
    %c0_i32_1 = arith.constant 0 : i32
    %c0_i32_2 = arith.constant 0 : i32
    return %c0_i32, %c0_i32_0, %c0_i32_1 : i32, i32, i32
  }
  func.func @transform_4(%arg0: i32) -> (i32, i32, i32) {
    %c0_i32 = arith.constant 0 : i32
    %c0_i32_0 = arith.constant 0 : i32
    %c0_i32_1 = arith.constant 0 : i32
    %c0_i32_2 = arith.constant 0 : i32
    return %c0_i32, %c0_i32_0, %c0_i32_1 : i32, i32, i32
  }
  func.func @transform_5(%arg0: i32) -> (i32, i32) {
    %c0_i32 = arith.constant 0 : i32
    %c0_i32_0 = arith.constant 0 : i32
    %c0_i32_1 = arith.constant 0 : i32
    return %c0_i32, %c0_i32_0 : i32, i32
  }
  func.func @transform_6(%arg0: i32) -> (i32, i32) {
    %c0_i32 = arith.constant 0 : i32
    %c0_i32_0 = arith.constant 0 : i32
    %c0_i32_1 = arith.constant 0 : i32
    return %c0_i32, %c0_i32_0 : i32, i32
  }
  func.func @transform_7(%arg0: i32) -> (i32, i32) {
    %c0_i32 = arith.constant 0 : i32
    %c0_i32_0 = arith.constant 0 : i32
    %c0_i32_1 = arith.constant 0 : i32
    return %c0_i32, %c0_i32_0 : i32, i32
  }
  func.func @transform_8(%arg0: i32) -> (i32, i32) {
    %c0_i32 = arith.constant 0 : i32
    %c0_i32_0 = arith.constant 0 : i32
    return %arg0, %c0_i32 : i32, i32
  }
}

</mosaic_0001>

<llo_original>
// kernel: tpu_custom_call.1
$region0: #{tpu_custom_call.1}
  #allocation0 [shape = 'u32[]', space=smem, size = 0x4, offset = 0x4, fixed_abs, tag = 'smem constant byte address 0x4 - core index']
  #allocation1 [shape = 'u32[144,128]{1,0:T(1,128)}', space=vmem, size = 0x12000, scoped, tag = 'internal scratch']
  #allocation2 [shape = 'f32[8,16]{1,0:T(8,128)}', space=vmem, size = 0x1000, scoped, tag = 'scratch operand']
  %s0 = inlined_call_operand.vmem [shape: f32[8,16], index: 0, kind: input, shape index: {}]
  %s1 = inlined_call_operand.vmem [shape: f32[16,32], index: 1, kind: input, shape index: {}]
  %s2 = inlined_call_operand.vmem [shape: f32[1,32], index: 2, kind: input, shape index: {}]
  %s3 = inlined_call_operand.hbm [shape: f32[2,32,32], index: 3, kind: input, shape index: {}]
  %s4 = inlined_call_operand.vmem [shape: f32[2,1,32], index: 4, kind: input, shape index: {}]
  %s5 = inlined_call_operand.vmem [shape: f32[16,16], index: 5, kind: input, shape index: {}]
  %s6 = inlined_call_operand.vmem [shape: f32[32,16], index: 6, kind: input, shape index: {}]
  %s7 = inlined_call_operand.vmem [shape: f32[1,16], index: 7, kind: input, shape index: {}]
  %s8 = inlined_call_operand.hbm [shape: f32[8,16], index: 8, kind: output, shape index: {}]
  %s9 = sld [smem:[#allocation0]]
  $region46: #{tpu_custom_call.1} parent=0
    _
  %s11 = ssub.s32 1, %s9
  %s12 = scalar_select 0, %s11, %s9
  $region1: #{tpu_custom_call.1} parent=0
    #allocation3 [shape = 'u8[32768]{0}', space=vmem, size = 0x8000, scoped, tag = 'input window, operand 3, single buffered']
    #allocation4 [shape = 's32[1]{0}', space=sflag, size = 0x4, scoped, tag = 'scoped memory for tpu_custom_call.1']
    #allocation5 [shape = 's32[1]{0}', space=sflag, size = 0x4, scoped, tag = 'scoped memory for tpu_custom_call.1']
    #allocation6 [shape = 'u8[4096]{0}', space=vmem, size = 0x1000, scoped, tag = 'output window, operand 0, single buffered']
    %13 = vsyncpa [#allocation4], 0
    %14 = vsyncpa [#allocation5], 0
    // Predicated region
    $region2: #{tpu_custom_call.1} parent=1 // pred_check
      _
    $region3: #{tpu_custom_call.1} parent=1 // pred_check_branch
      %16 = sbr.rel (0) target = $region5
    $region4: #{tpu_custom_call.1} parent=1 // pred_region
      _
    $region5: #{tpu_custom_call.1} parent=1 // pred_fallthru
      _
    // Predicated region
    $region6: #{tpu_custom_call.1} parent=1 // pred_check
      _
    $region7: #{tpu_custom_call.1} parent=1 // pred_check_branch
      %18 = sbr.rel (0) target = $region9
    $region8: #{tpu_custom_call.1} parent=1 // pred_region
      _
    $region9: #{tpu_custom_call.1} parent=1 // pred_fallthru
      _
    // Predicated region
    $region10: #{tpu_custom_call.1} parent=1 // pred_check
      _
    $region11: #{tpu_custom_call.1} parent=1 // pred_check_branch
      %20 = sbr.rel (0) target = $region13
    $region12: #{tpu_custom_call.1} parent=1 // pred_region
      _
    $region13: #{tpu_custom_call.1} parent=1 // pred_fallthru
      _
    // Predicated region
    $region14: #{tpu_custom_call.1} parent=1 // pred_check
      _
    $region15: #{tpu_custom_call.1} parent=1 // pred_check_branch
      %22 = sbr.rel (0) target = $region17
    $region16: #{tpu_custom_call.1} parent=1 // pred_region
      %s24 = ssub.s32 1024, 1024
      %25 = vsyncadd [#allocation4], %s24
      %s26 = sshll.u32 [#allocation3], 4
      %s27 = int_to_ptr.vmem [resolvable:$true] %s26
      %32 = dma.hbm_to_vmem [thread:$0]  %s3, 1024, %s27, [#allocation4], 128, 128, 8
    $region17: #{tpu_custom_call.1} parent=1 // pred_fallthru
      _
    // Predicated region
    $region18: #{tpu_custom_call.1} parent=1 // pred_check
      _
    $region19: #{tpu_custom_call.1} parent=1 // pred_check_branch
      %34 = sbr.rel (0) target = $region21
    $region20: #{tpu_custom_call.1} parent=1 // pred_region
      _
    $region21: #{tpu_custom_call.1} parent=1 // pred_fallthru
      _
    // Predicated region
    $region22: #{tpu_custom_call.1} parent=1 // pred_check
      _
    $region23: #{tpu_custom_call.1} parent=1 // pred_check_branch
      %36 = sbr.rel (0) target = $region25
    $region24: #{tpu_custom_call.1} parent=1 // pred_region
      _
    $region25: #{tpu_custom_call.1} parent=1 // pred_fallthru
      _
    // Predicated region
    $region26: #{tpu_custom_call.1} parent=1 // pred_check
      _
    $region27: #{tpu_custom_call.1} parent=1 // pred_check_branch
      %38 = sbr.rel (0) target = $region29
    $region28: #{tpu_custom_call.1} parent=1 // pred_region
      _
    $region29: #{tpu_custom_call.1} parent=1 // pred_fallthru
      _
    // Predicated region
    $region30: #{tpu_custom_call.1} parent=1 // pred_check
      _
    $region31: #{tpu_custom_call.1} parent=1 // pred_check_branch
      %40 = sbr.rel (0) target = $region33
    $region32: #{tpu_custom_call.1} parent=1 // pred_region
      _
    $region33: #{tpu_custom_call.1} parent=1 // pred_fallthru
      _
    // Predicated region
    $region34: #{tpu_custom_call.1} parent=1 // pred_check
      _
    $region35: #{tpu_custom_call.1} parent=1 // pred_check_branch
      %42 = sbr.rel (0) target = $region37
    $region36: #{tpu_custom_call.1} parent=1 // pred_region
      %43 = dma.done [#allocation4], 1024
    $region37: #{tpu_custom_call.1} parent=1 // pred_fallthru
      _
    %v44 = vld [vmem:[%s0] sm:$0xff]
    %v45 = vld [vmem:[%s5] sm:$0xff]
    %v46 = vld [vmem:[%s5 + $0x8] sm:$0xff]
    %v47 = vld [vmem:[%s7] sm:$0x1]
    %v49 = vlaneseq
    %v50 = vshrl.u32 %v49, 7
    %v51 = vsub.s32 0, %v50
    %v52 = vrot.slane %v47, %v51
    %vm54 = vcmask 130048
    %v56 = vsel %vm54, %v44, 0
    %58 = vmatprep.subr.mxu0 0.0
    %59 = vmatpush1.msra.mxu0 %v45
    %60 = vmatprep.subr.mxu0 0.0
    %61 = vmatpush1.msra.mxu0 %v46
    %62 = vmatprep.subr.mxu0 0.0
    %63 = vmatpush1.msra.mxu0 0.0
    %64 = vmatprep.subr.mxu0 0.0
    %65 = vmatpush1.msra.mxu0 0.0
    %66 = vmatprep.subr.mxu0 0.0
    %67 = vmatpush1.msra.mxu0 0.0
    %68 = vmatprep.subr.mxu0 0.0
    %69 = vmatpush1.msra.mxu0 0.0
    %70 = vmatprep.subr.mxu0 0.0
    %71 = vmatpush1.msra.mxu0 0.0
    %72 = vmatprep.subr.mxu0 0.0
    %73 = vmatpush1.msra.mxu0 0.0
    %74 = vmatprep.subr.mxu0 0.0
    %75 = vmatpush1.msra.mxu0 0.0
    %76 = vmatprep.subr.mxu0 0.0
    %77 = vmatpush1.msra.mxu0 0.0
    %78 = vmatprep.subr.mxu0 0.0
    %79 = vmatpush1.msra.mxu0 0.0
    %80 = vmatprep.subr.mxu0 0.0
    %81 = vmatpush1.msra.mxu0 0.0
    %82 = vmatprep.subr.mxu0 0.0
    %83 = vmatpush1.msra.mxu0 0.0
    %84 = vmatprep.subr.mxu0 0.0
    %85 = vmatpush1.msra.mxu0 0.0
    %86 = vmatprep.subr.mxu0 0.0
    %87 = vmatpush1.msra.mxu0 0.0
    %88 = vmatprep.subr.mxu0 0.0
    %89 = vmatpush1.msra.mxu0 0.0
    %90 = vmatprep.subr.mxu0 0.0
    %91 = vmatpush1.msra.mxu0 0.0
    %92 = vmatprep.subr.mxu0 0.0
    %93 = vmatpush1.msra.mxu0 0.0
    %94 = vmatprep.subr.mxu0 0.0
    %95 = vmatpush1.msra.mxu0 0.0
    %96 = vmatprep.subr.mxu0 0.0
    %97 = vmatpush1.msra.mxu0 0.0
    %98 = vmatprep.subr.mxu0 0.0
    %99 = vmatpush1.msra.mxu0 0.0
    %100 = vmatprep.subr.mxu0 0.0
    %101 = vmatpush1.msra.mxu0 0.0
    %102 = vmatprep.subr.mxu0 0.0
    %103 = vmatpush1.msra.mxu0 0.0
    %104 = vmatprep.subr.mxu0 0.0
    %105 = vmatpush1.msra.mxu0 0.0
    %106 = vmatprep.subr.mxu0 0.0
    %107 = vmatpush1.msra.mxu0 0.0
    %108 = vmatprep.subr.mxu0 0.0
    %109 = vmatpush1.msra.mxu0 0.0
    %110 = vmatprep.subr.mxu0 0.0
    %111 = vmatpush1.msra.mxu0 0.0
    %112 = vmatprep.subr.mxu0 0.0
    %113 = vmatpush1.msra.mxu0 0.0
    %114 = vmatprep.subr.mxu0 0.0
    %115 = vmatpush1.msra.mxu0 0.0
    %116 = vmatprep.subr.mxu0 0.0
    %117 = vmatpush1.msra.mxu0 0.0
    %118 = vmatprep.subr.mxu0 0.0
    %119 = vmatpush1.msra.mxu0 0.0
    %120 = vmatprep.subr.mxu0 0.0
    %121 = vmatpush1.msra.mxu0 0.0
    %122 = vmatprep.mubr.f32.mxu0 0.0
    %123 = vmatmul.mubr.f32.gmra.mrb[0].mxu0 %v56
    %v124 = vpop.f32.mrb[0].mxu0
    %v125 = vadd.f32 %v52, %v124
    %v126 = vpop.f32.mrb[0].mxu0
    %127 = vdwg.mxu0
    %128 = vst.msk [vmem:[#allocation2] sm:$0xff] %vm54, %v125
    %v129 = vld [vmem:[%s1] sm:$0xff]
    %v130 = vld [vmem:[%s1 + $0x8] sm:$0xff]
    %v131 = vld [vmem:[%s2] sm:$0x1]
    %v133 = vlaneseq
    %v134 = vshrl.u32 %v133, 7
    %v135 = vsub.s32 0, %v134
    %v136 = vrot.slane %v131, %v135
    %138 = vmatprep.subr.mxu0 0.0
    %139 = vmatpush1.msra.mxu0 %v129
    %140 = vmatprep.subr.mxu0 0.0
    %141 = vmatpush1.msra.mxu0 %v130
    %142 = vmatprep.subr.mxu0 0.0
    %143 = vmatpush1.msra.mxu0 0.0
    %144 = vmatprep.subr.mxu0 0.0
    %145 = vmatpush1.msra.mxu0 0.0
    %146 = vmatprep.subr.mxu0 0.0
    %147 = vmatpush1.msra.mxu0 0.0
    %148 = vmatprep.subr.mxu0 0.0
    %149 = vmatpush1.msra.mxu0 0.0
    %150 = vmatprep.subr.mxu0 0.0
    %151 = vmatpush1.msra.mxu0 0.0
    %152 = vmatprep.subr.mxu0 0.0
    %153 = vmatpush1.msra.mxu0 0.0
    %154 = vmatprep.subr.mxu0 0.0
    %155 = vmatpush1.msra.mxu0 0.0
    %156 = vmatprep.subr.mxu0 0.0
    %157 = vmatpush1.msra.mxu0 0.0
    %158 = vmatprep.subr.mxu0 0.0
    %159 = vmatpush1.msra.mxu0 0.0
    %160 = vmatprep.subr.mxu0 0.0
    %161 = vmatpush1.msra.mxu0 0.0
    %162 = vmatprep.subr.mxu0 0.0
    %163 = vmatpush1.msra.mxu0 0.0
    %164 = vmatprep.subr.mxu0 0.0
    %165 = vmatpush1.msra.mxu0 0.0
    %166 = vmatprep.subr.mxu0 0.0
    %167 = vmatpush1.msra.mxu0 0.0
    %168 = vmatprep.subr.mxu0 0.0
    %169 = vmatpush1.msra.mxu0 0.0
    %170 = vmatprep.subr.mxu0 0.0
    %171 = vmatpush1.msra.mxu0 0.0
    %172 = vmatprep.subr.mxu0 0.0
    %173 = vmatpush1.msra.mxu0 0.0
    %174 = vmatprep.subr.mxu0 0.0
    %175 = vmatpush1.msra.mxu0 0.0
    %176 = vmatprep.subr.mxu0 0.0
    %177 = vmatpush1.msra.mxu0 0.0
    %178 = vmatprep.subr.mxu0 0.0
    %179 = vmatpush1.msra.mxu0 0.0
    %180 = vmatprep.subr.mxu0 0.0
    %181 = vmatpush1.msra.mxu0 0.0
    %182 = vmatprep.subr.mxu0 0.0
    %183 = vmatpush1.msra.mxu0 0.0
    %184 = vmatprep.subr.mxu0 0.0
    %185 = vmatpush1.msra.mxu0 0.0
    %186 = vmatprep.subr.mxu0 0.0
    %187 = vmatpush1.msra.mxu0 0.0
    %188 = vmatprep.subr.mxu0 0.0
    %189 = vmatpush1.msra.mxu0 0.0
    %190 = vmatprep.subr.mxu0 0.0
    %191 = vmatpush1.msra.mxu0 0.0
    %192 = vmatprep.subr.mxu0 0.0
    %193 = vmatpush1.msra.mxu0 0.0
    %194 = vmatprep.subr.mxu0 0.0
    %195 = vmatpush1.msra.mxu0 0.0
    %196 = vmatprep.subr.mxu0 0.0
    %197 = vmatpush1.msra.mxu0 0.0
    %198 = vmatprep.subr.mxu0 0.0
    %199 = vmatpush1.msra.mxu0 0.0
    %200 = vmatprep.subr.mxu0 0.0
    %201 = vmatpush1.msra.mxu0 0.0
    %202 = vmatprep.mubr.f32.mxu0 0.0
    %203 = vmatmul.mubr.f32.gmra.mrb[0].mxu0 %v56
    %v204 = vpop.f32.mrb[0].mxu0
    %v205 = vadd.f32 %v136, %v204
    %v206 = vpop.f32.mrb[0].mxu0
    %207 = vdwg.mxu0
    %v208 = vld [vmem:[#allocation3] sm:$0xff]
    %v209 = vld [vmem:[#allocation3 + $0x8] sm:$0xff]
    %v210 = vld [vmem:[#allocation3 + $0x10] sm:$0xff]
    %v211 = vld [vmem:[#allocation3 + $0x18] sm:$0xff]
    %v212 = vld [vmem:[%s4] sm:$0x1]
    %v214 = vlaneseq
    %v215 = vshrl.u32 %v214, 7
    %v216 = vsub.s32 0, %v215
    %v217 = vrot.slane %v212, %v216
    %vm219 = vcmask 261120
    %v221 = vsel %vm219, %v205, 0
    %223 = vmatprep.subr.mxu0 0.0
    %224 = vmatpush1.msra.mxu0 %v208
    %225 = vmatprep.subr.mxu0 0.0
    %226 = vmatpush1.msra.mxu0 %v209
    %227 = vmatprep.subr.mxu0 0.0
    %228 = vmatpush1.msra.mxu0 %v210
    %229 = vmatprep.subr.mxu0 0.0
    %230 = vmatpush1.msra.mxu0 %v211
    %231 = vmatprep.subr.mxu0 0.0
    %232 = vmatpush1.msra.mxu0 0.0
    %233 = vmatprep.subr.mxu0 0.0
    %234 = vmatpush1.msra.mxu0 0.0
    %235 = vmatprep.subr.mxu0 0.0
    %236 = vmatpush1.msra.mxu0 0.0
    %237 = vmatprep.subr.mxu0 0.0
    %238 = vmatpush1.msra.mxu0 0.0
    %239 = vmatprep.subr.mxu0 0.0
    %240 = vmatpush1.msra.mxu0 0.0
    %241 = vmatprep.subr.mxu0 0.0
    %242 = vmatpush1.msra.mxu0 0.0
    %243 = vmatprep.subr.mxu0 0.0
    %244 = vmatpush1.msra.mxu0 0.0
    %245 = vmatprep.subr.mxu0 0.0
    %246 = vmatpush1.msra.mxu0 0.0
    %247 = vmatprep.subr.mxu0 0.0
    %248 = vmatpush1.msra.mxu0 0.0
    %249 = vmatprep.subr.mxu0 0.0
    %250 = vmatpush1.msra.mxu0 0.0
    %251 = vmatprep.subr.mxu0 0.0
    %252 = vmatpush1.msra.mxu0 0.0
    %253 = vmatprep.subr.mxu0 0.0
    %254 = vmatpush1.msra.mxu0 0.0
    %255 = vmatprep.subr.mxu0 0.0
    %256 = vmatpush1.msra.mxu0 0.0
    %257 = vmatprep.subr.mxu0 0.0
    %258 = vmatpush1.msra.mxu0 0.0
    %259 = vmatprep.subr.mxu0 0.0
    %260 = vmatpush1.msra.mxu0 0.0
    %261 = vmatprep.subr.mxu0 0.0
    %262 = vmatpush1.msra.mxu0 0.0
    %263 = vmatprep.subr.mxu0 0.0
    %264 = vmatpush1.msra.mxu0 0.0
    %265 = vmatprep.subr.mxu0 0.0
    %266 = vmatpush1.msra.mxu0 0.0
    %267 = vmatprep.subr.mxu0 0.0
    %268 = vmatpush1.msra.mxu0 0.0
    %269 = vmatprep.subr.mxu0 0.0
    %270 = vmatpush1.msra.mxu0 0.0
    %271 = vmatprep.subr.mxu0 0.0
    %272 = vmatpush1.msra.mxu0 0.0
    %273 = vmatprep.subr.mxu0 0.0
    %274 = vmatpush1.msra.mxu0 0.0
    %275 = vmatprep.subr.mxu0 0.0
    %276 = vmatpush1.msra.mxu0 0.0
    %277 = vmatprep.subr.mxu0 0.0
    %278 = vmatpush1.msra.mxu0 0.0
    %279 = vmatprep.subr.mxu0 0.0
    %280 = vmatpush1.msra.mxu0 0.0
    %281 = vmatprep.subr.mxu0 0.0
    %282 = vmatpush1.msra.mxu0 0.0
    %283 = vmatprep.subr.mxu0 0.0
    %284 = vmatpush1.msra.mxu0 0.0
    %285 = vmatprep.subr.mxu0 0.0
    %286 = vmatpush1.msra.mxu0 0.0
    %287 = vmatprep.mubr.f32.mxu0 0.0
    %288 = vmatmul.mubr.f32.gmra.mrb[0].mxu0 %v221
    %v289 = vpop.f32.mrb[0].mxu0
    %v290 = vadd.f32 %v217, %v289
    %v291 = vpop.f32.mrb[0].mxu0
    %292 = vdwg.mxu0
    %v293 = vmax.f32 %v290, 0.0
    %s294 = scalar_lea.vmem [#allocation3], 32
    %v295 = vld [vmem:[%s294] sm:$0xff]
    %v296 = vld [vmem:[%s294 + $0x8] sm:$0xff]
    %v297 = vld [vmem:[%s294 + $0x10] sm:$0xff]
    %v298 = vld [vmem:[%s294 + $0x18] sm:$0xff]
    %s299 = scalar_lea.vmem %s4, 1
    %v300 = vld [vmem:[%s299] sm:$0x1]
    %v302 = vlaneseq
    %v303 = vshrl.u32 %v302, 7
    %v304 = vsub.s32 0, %v303
    %v305 = vrot.slane %v300, %v304
    %v308 = vsel %vm219, %v293, 0
    %310 = vmatprep.subr.mxu0 0.0
    %311 = vmatpush1.msra.mxu0 %v295
    %312 = vmatprep.subr.mxu0 0.0
    %313 = vmatpush1.msra.mxu0 %v296
    %314 = vmatprep.subr.mxu0 0.0
    %315 = vmatpush1.msra.mxu0 %v297
    %316 = vmatprep.subr.mxu0 0.0
    %317 = vmatpush1.msra.mxu0 %v298
    %318 = vmatprep.subr.mxu0 0.0
    %319 = vmatpush1.msra.mxu0 0.0
    %320 = vmatprep.subr.mxu0 0.0
    %321 = vmatpush1.msra.mxu0 0.0
    %322 = vmatprep.subr.mxu0 0.0
    %323 = vmatpush1.msra.mxu0 0.0
    %324 = vmatprep.subr.mxu0 0.0
    %325 = vmatpush1.msra.mxu0 0.0
    %326 = vmatprep.subr.mxu0 0.0
    %327 = vmatpush1.msra.mxu0 0.0
    %328 = vmatprep.subr.mxu0 0.0
    %329 = vmatpush1.msra.mxu0 0.0
    %330 = vmatprep.subr.mxu0 0.0
    %331 = vmatpush1.msra.mxu0 0.0
    %332 = vmatprep.subr.mxu0 0.0
    %333 = vmatpush1.msra.mxu0 0.0
    %334 = vmatprep.subr.mxu0 0.0
    %335 = vmatpush1.msra.mxu0 0.0
    %336 = vmatprep.subr.mxu0 0.0
    %337 = vmatpush1.msra.mxu0 0.0
    %338 = vmatprep.subr.mxu0 0.0
    %339 = vmatpush1.msra.mxu0 0.0
    %340 = vmatprep.subr.mxu0 0.0
    %341 = vmatpush1.msra.mxu0 0.0
    %342 = vmatprep.subr.mxu0 0.0
    %343 = vmatpush1.msra.mxu0 0.0
    %344 = vmatprep.subr.mxu0 0.0
    %345 = vmatpush1.msra.mxu0 0.0
    %346 = vmatprep.subr.mxu0 0.0
    %347 = vmatpush1.msra.mxu0 0.0
    %348 = vmatprep.subr.mxu0 0.0
    %349 = vmatpush1.msra.mxu0 0.0
    %350 = vmatprep.subr.mxu0 0.0
    %351 = vmatpush1.msra.mxu0 0.0
    %352 = vmatprep.subr.mxu0 0.0
    %353 = vmatpush1.msra.mxu0 0.0
    %354 = vmatprep.subr.mxu0 0.0
    %355 = vmatpush1.msra.mxu0 0.0
    %356 = vmatprep.subr.mxu0 0.0
    %357 = vmatpush1.msra.mxu0 0.0
    %358 = vmatprep.subr.mxu0 0.0
    %359 = vmatpush1.msra.mxu0 0.0
    %360 = vmatprep.subr.mxu0 0.0
    %361 = vmatpush1.msra.mxu0 0.0
    %362 = vmatprep.subr.mxu0 0.0
    %363 = vmatpush1.msra.mxu0 0.0
    %364 = vmatprep.subr.mxu0 0.0
    %365 = vmatpush1.msra.mxu0 0.0
    %366 = vmatprep.subr.mxu0 0.0
    %367 = vmatpush1.msra.mxu0 0.0
    %368 = vmatprep.subr.mxu0 0.0
    %369 = vmatpush1.msra.mxu0 0.0
    %370 = vmatprep.subr.mxu0 0.0
    %371 = vmatpush1.msra.mxu0 0.0
    %372 = vmatprep.subr.mxu0 0.0
    %373 = vmatpush1.msra.mxu0 0.0
    %374 = vmatprep.mubr.f32.mxu0 0.0
    %375 = vmatmul.mubr.f32.gmra.mrb[0].mxu0 %v308
    %v376 = vpop.f32.mrb[0].mxu0
    %v377 = vadd.f32 %v305, %v376
    %v378 = vpop.f32.mrb[0].mxu0
    %379 = vdwg.mxu0
    %v380 = vmax.f32 %v377, 0.0
    %v381 = vld [vmem:[#allocation2] sm:$0xff]
    %v382 = vld [vmem:[%s6] sm:$0xff]
    %v383 = vld [vmem:[%s6 + $0x8] sm:$0xff]
    %v384 = vld [vmem:[%s6 + $0x10] sm:$0xff]
    %v385 = vld [vmem:[%s6 + $0x18] sm:$0xff]
    %v387 = vsel %vm219, %v380, 0
    %389 = vmatprep.subr.mxu0 0.0
    %390 = vmatpush1.msra.mxu0 %v382
    %391 = vmatprep.subr.mxu0 0.0
    %392 = vmatpush1.msra.mxu0 %v383
    %393 = vmatprep.subr.mxu0 0.0
    %394 = vmatpush1.msra.mxu0 %v384
    %395 = vmatprep.subr.mxu0 0.0
    %396 = vmatpush1.msra.mxu0 %v385
    %397 = vmatprep.subr.mxu0 0.0
    %398 = vmatpush1.msra.mxu0 0.0
    %399 = vmatprep.subr.mxu0 0.0
    %400 = vmatpush1.msra.mxu0 0.0
    %401 = vmatprep.subr.mxu0 0.0
    %402 = vmatpush1.msra.mxu0 0.0
    %403 = vmatprep.subr.mxu0 0.0
    %404 = vmatpush1.msra.mxu0 0.0
    %405 = vmatprep.subr.mxu0 0.0
    %406 = vmatpush1.msra.mxu0 0.0
    %407 = vmatprep.subr.mxu0 0.0
    %408 = vmatpush1.msra.mxu0 0.0
    %409 = vmatprep.subr.mxu0 0.0
    %410 = vmatpush1.msra.mxu0 0.0
    %411 = vmatprep.subr.mxu0 0.0
    %412 = vmatpush1.msra.mxu0 0.0
    %413 = vmatprep.subr.mxu0 0.0
    %414 = vmatpush1.msra.mxu0 0.0
    %415 = vmatprep.subr.mxu0 0.0
    %416 = vmatpush1.msra.mxu0 0.0
    %417 = vmatprep.subr.mxu0 0.0
    %418 = vmatpush1.msra.mxu0 0.0
    %419 = vmatprep.subr.mxu0 0.0
    %420 = vmatpush1.msra.mxu0 0.0
    %421 = vmatprep.subr.mxu0 0.0
    %422 = vmatpush1.msra.mxu0 0.0
    %423 = vmatprep.subr.mxu0 0.0
    %424 = vmatpush1.msra.mxu0 0.0
    %425 = vmatprep.subr.mxu0 0.0
    %426 = vmatpush1.msra.mxu0 0.0
    %427 = vmatprep.subr.mxu0 0.0
    %428 = vmatpush1.msra.mxu0 0.0
    %429 = vmatprep.subr.mxu0 0.0
    %430 = vmatpush1.msra.mxu0 0.0
    %431 = vmatprep.subr.mxu0 0.0
    %432 = vmatpush1.msra.mxu0 0.0
    %433 = vmatprep.subr.mxu0 0.0
    %434 = vmatpush1.msra.mxu0 0.0
    %435 = vmatprep.subr.mxu0 0.0
    %436 = vmatpush1.msra.mxu0 0.0
    %437 = vmatprep.subr.mxu0 0.0
    %438 = vmatpush1.msra.mxu0 0.0
    %439 = vmatprep.subr.mxu0 0.0
    %440 = vmatpush1.msra.mxu0 0.0
    %441 = vmatprep.subr.mxu0 0.0
    %442 = vmatpush1.msra.mxu0 0.0
    %443 = vmatprep.subr.mxu0 0.0
    %444 = vmatpush1.msra.mxu0 0.0
    %445 = vmatprep.subr.mxu0 0.0
    %446 = vmatpush1.msra.mxu0 0.0
    %447 = vmatprep.subr.mxu0 0.0
    %448 = vmatpush1.msra.mxu0 0.0
    %449 = vmatprep.subr.mxu0 0.0
    %450 = vmatpush1.msra.mxu0 0.0
    %451 = vmatprep.subr.mxu0 0.0
    %452 = vmatpush1.msra.mxu0 0.0
    %453 = vmatprep.mubr.f32.mxu0 0.0
    %454 = vmatmul.mubr.f32.gmra.mrb[0].mxu0 %v387
    %v455 = vpop.f32.mrb[0].mxu0
    %v456 = vadd.f32 0.0, %v455
    %v457 = vpop.f32.mrb[0].mxu0
    %458 = vdwg.mxu0
    %v459 = vadd.f32 %v381, %v456
    %460 = vst.msk [vmem:[#allocation6] sm:$0xff] %vm54, %v459
    // Predicated region
    $region38: #{tpu_custom_call.1} parent=1 // pred_check
      _
    $region39: #{tpu_custom_call.1} parent=1 // pred_check_branch
      %462 = sbr.rel (0) target = $region41
    $region40: #{tpu_custom_call.1} parent=1 // pred_region
      %s464 = ssub.s32 128, 128
      %465 = vsyncadd [#allocation5], %s464
      %s467 = sshll.u32 [#allocation6], 4
      %s468 = int_to_ptr.vmem [resolvable:$true] %s467
      %470 = dma.vmem_to_hbm [thread:$0]  %s468, 128, %s8, [#allocation5]
    $region41: #{tpu_custom_call.1} parent=1 // pred_fallthru
      _
    // Predicated region
    $region42: #{tpu_custom_call.1} parent=1 // pred_check
      _
    $region43: #{tpu_custom_call.1} parent=1 // pred_check_branch
      %472 = sbr.rel (0) target = $region45
    $region44: #{tpu_custom_call.1} parent=1 // pred_region
      %473 = dma.done [#allocation5], 128
    $region45: #{tpu_custom_call.1} parent=1 // pred_fallthru
      _
    %474 = vsyncpa [#allocation4], 1
    %475 = vsyncpa [#allocation5], 1

</llo_original>
